<compile_context>
chip_gen: v7x
topology: tpu7x:2x2x1
jax: 0.10.0
libtpu: 0.0.40
codegen_flags: <defaults>
</compile_context>

<pallas_src>
import functools

import jax
import jax.numpy as jnp
from jax import lax
from jax.experimental import pallas as pl
from jax.experimental.pallas import tpu as pltpu

TARGET_MAX = 5.0
TARGET_MIN = 1.0

_LANE = 128
_SUBLANE = 8
_MAX_BLOCK_ROWS = 4096  # 4096 x 128 f32 = 2 MiB per input per pipeline buffer
_N_CORES = 2            # leading parallel axis (both TCs on v7x; harmless on v5e/v6e)


def _round_up(x: int, m: int) -> int:
    return (x + m - 1) // m * m


def _bce_partial_kernel(preds_ref, target_ref, out_ref, *,
                        total_elems, rows_per_core, block_rows,
                        t_min, inv_range):
    c = pl.program_id(0)
    s = pl.program_id(1)

    @pl.when(s == 0)
    def _():
        out_ref[...] = jnp.zeros_like(out_ref)

    x = preds_ref[0].astype(jnp.float32)                      # (block_rows, 128)
    z = (target_ref[0].astype(jnp.float32) - t_min) * inv_range

    # Numerically stable BCE-with-logits (matches torch's formulation):
    #   l = max(x, 0) - x*z + log(1 + exp(-|x|))
    loss = jnp.maximum(x, 0.0) - x * z + jnp.log1p(jnp.exp(-jnp.abs(x)))

    # Mask out padded elements (padding appended at the end of the flat array).
    # TODO(synk): int32 flat index limits this mask to < 2^31 total elements.
    row0 = c * rows_per_core + s * block_rows
    rid = lax.broadcasted_iota(jnp.int32, (block_rows, _LANE), 0) + row0
    lid = lax.broadcasted_iota(jnp.int32, (block_rows, _LANE), 1)
    valid = (rid * _LANE + lid) < total_elems
    loss = jnp.where(valid, loss, 0.0)

    # Lane-wise accumulation down to one (8,128) vreg: pure VPU elementwise adds,
    # no per-step cross-lane reduction.
    out_ref[0] += loss.reshape(block_rows // _SUBLANE, _SUBLANE, _LANE).sum(axis=0)


def scaled_mc_bce_loss(preds, target,
                       target_max: float = TARGET_MAX,
                       target_min: float = TARGET_MIN):
    """Pallas implementation of ScaledMCBCELoss.forward. Returns a scalar f32."""
    assert preds.shape == target.shape
    total = preds.size

    p = preds.reshape(-1)
    t = target.reshape(-1)

    rows = -(-total // _LANE)
    rows_per_core = -(-rows // _N_CORES)
    block_rows = min(_MAX_BLOCK_ROWS, _round_up(max(rows_per_core, 1), _SUBLANE))
    steps = -(-rows_per_core // block_rows)
    rows_per_core = steps * block_rows
    padded = _N_CORES * rows_per_core * _LANE

    if padded != total:
        p = jnp.pad(p, (0, padded - total))
        t = jnp.pad(t, (0, padded - total))

    p3 = p.reshape(_N_CORES, rows_per_core, _LANE)   # original dtype — no upcast
    t3 = t.reshape(_N_CORES, rows_per_core, _LANE)

    kernel = functools.partial(
        _bce_partial_kernel,
        total_elems=total,
        rows_per_core=rows_per_core,
        block_rows=block_rows,
        t_min=float(target_min),
        inv_range=1.0 / (float(target_max) - float(target_min)),
    )

    partials = pl.pallas_call(
        kernel,
        out_shape=jax.ShapeDtypeStruct((_N_CORES, _SUBLANE, _LANE), jnp.float32),
        grid_spec=pltpu.PrefetchScalarGridSpec(
            num_scalar_prefetch=0,
            grid=(_N_CORES, steps),
            in_specs=[
                pl.BlockSpec((1, block_rows, _LANE), lambda c, s: (c, s, 0)),
                pl.BlockSpec((1, block_rows, _LANE), lambda c, s: (c, s, 0)),
            ],
            out_specs=pl.BlockSpec((1, _SUBLANE, _LANE), lambda c, s: (c, 0, 0)),
        ),
        compiler_params=pltpu.CompilerParams(
            dimension_semantics=("parallel", "arbitrary"),
        ),
    )(p3, t3)

    # Final tiny reduction of the 2 x 8 x 128 lane-wise partials in XLA.
    return jnp.sum(partials) / jnp.float32(total)


def _reference(preds, target, target_max=TARGET_MAX, target_min=TARGET_MIN):
    x = preds.astype(jnp.float32)
    z = (target.astype(jnp.float32) - target_min) / (target_max - target_min)
    loss = jnp.maximum(x, 0.0) - x * z + jnp.log1p(jnp.exp(-jnp.abs(x)))
    return jnp.mean(jnp.mean(loss, axis=0))


if __name__ == "__main__":
    key = jax.random.PRNGKey(0)
    k1, k2 = jax.random.split(key)

    # NCHW inputs, same convention as the PyTorch module.
    B, C, H, W = 2, 4, 16, 16
    preds = jax.random.normal(k1, (B, C, H, W), dtype=jnp.float32)
    target = jax.random.uniform(
        k2, (B, C, H, W), dtype=jnp.float32, minval=TARGET_MIN, maxval=TARGET_MAX
    )

    out = scaled_mc_bce_loss(preds, target)
    out = jax.block_until_ready(out)

    ref = _reference(preds, target)
    assert jnp.allclose(out, ref, rtol=1e-5, atol=1e-5), (out, ref)
    print("KERNEL_OK")
</pallas_src>

<mosaic_0001>
module attributes {stable_mosaic.version = 11 : i64} {
  func.func @_bce_partial_kernel(%arg0: i32, %arg1: i32, %arg2: memref<1x8x128xf32, #tpu.memory_space<vmem>>, %arg3: memref<1x8x128xf32, #tpu.memory_space<vmem>>, %arg4: memref<1x8x128xf32, #tpu.memory_space<vmem>>) attributes {dimension_semantics = [#tpu.dimension_semantics<parallel>, #tpu.dimension_semantics<arbitrary>], iteration_bounds = array<i64: 2, 1>, scalar_prefetch = 0 : i64, scratch_operands = 0 : i64, tpu.core_type = #tpu.core_type<tc>, window_params = [{transform_indices = @transform_0, window_bounds = array<i64: 1, 8, 128>}, {transform_indices = @transform_1, window_bounds = array<i64: 1, 8, 128>}, {transform_indices = @transform_2, window_bounds = array<i64: 1, 8, 128>}]} {
    %c0_i32 = arith.constant 0 : i32
    %0 = arith.cmpi eq, %arg1, %c0_i32 : i32
    %1 = arith.extui %0 : i1 to i32
    %c0_i32_0 = arith.constant 0 : i32
    %2 = arith.cmpi ne, %1, %c0_i32_0 : i32
    scf.if %2 {
      %cst_18 = arith.constant 0.000000e+00 : f32
      %43 = vector.broadcast %cst_18 : f32 to vector<1x8x128xf32>
      %c0_19 = arith.constant 0 : index
      %c0_20 = arith.constant 0 : index
      %c0_21 = arith.constant 0 : index
      %44 = vector.load %arg4[%c0_19, %c0_20, %c0_21] : memref<1x8x128xf32, #tpu.memory_space<vmem>>, vector<1x8x128xf32>
      tpu.vector_store %arg4[%c0_19, %c0_20, %c0_21], %43 {strides = array<i32>} : memref<1x8x128xf32, #tpu.memory_space<vmem>>, vector<1x8x128xf32>,
    } else {
    }
    %c0 = arith.constant 0 : index
    %c0_1 = arith.constant 0 : index
    %c0_2 = arith.constant 0 : index
    %3 = vector.load %arg2[%c0, %c0_1, %c0_2] : memref<1x8x128xf32, #tpu.memory_space<vmem>>, vector<1x8x128xf32>
    %4 = vector.shape_cast %3 : vector<1x8x128xf32> to vector<8x128xf32>
    %c0_3 = arith.constant 0 : index
    %c0_4 = arith.constant 0 : index
    %c0_5 = arith.constant 0 : index
    %5 = vector.load %arg3[%c0_3, %c0_4, %c0_5] : memref<1x8x128xf32, #tpu.memory_space<vmem>>, vector<1x8x128xf32>
    %6 = vector.shape_cast %5 : vector<1x8x128xf32> to vector<8x128xf32>
    %cst = arith.constant 1.000000e+00 : f32
    %7 = vector.broadcast %cst : f32 to vector<8x128xf32>
    %8 = arith.subf %6, %7 : vector<8x128xf32>
    %cst_6 = arith.constant 2.500000e-01 : f32
    %9 = vector.broadcast %cst_6 : f32 to vector<8x128xf32>
    %10 = arith.mulf %8, %9 : vector<8x128xf32>
    %cst_7 = arith.constant 0.000000e+00 : f32
    %11 = vector.broadcast %cst_7 : f32 to vector<8x128xf32>
    %12 = arith.maximumf %4, %11 : vector<8x128xf32>
    %13 = arith.mulf %4, %10 : vector<8x128xf32>
    %14 = arith.subf %12, %13 : vector<8x128xf32>
    %15 = math.absf %4 : vector<8x128xf32>
    %cst_8 = arith.constant 0.000000e+00 : f32
    %16 = vector.broadcast %cst_8 : f32 to vector<8x128xf32>
    %17 = arith.subf %16, %15 : vector<8x128xf32>
    %18 = math.exp %17 : vector<8x128xf32>
    %19 = math.log1p %18 : vector<8x128xf32>
    %20 = arith.addf %14, %19 : vector<8x128xf32>
    %c8_i32 = arith.constant 8 : i32
    %21 = arith.muli %arg0, %c8_i32 : i32
    %c8_i32_9 = arith.constant 8 : i32
    %22 = arith.muli %arg1, %c8_i32_9 : i32
    %23 = arith.addi %21, %22 : i32
    %24 = tpu.iota {dimensions = array<i32: 0>} : vector<8x128xi32>
    %25 = vector.broadcast %23 : i32 to vector<8x128xi32>
    %26 = arith.addi %24, %25 : vector<8x128xi32>
    %27 = tpu.iota {dimensions = array<i32: 1>} : vector<8x128xi32>
    %c128_i32 = arith.constant 128 : i32
    %28 = vector.broadcast %c128_i32 : i32 to vector<8x128xi32>
    %29 = arith.muli %26, %28 : vector<8x128xi32>
    %30 = arith.addi %29, %27 : vector<8x128xi32>
    %c2048_i32 = arith.constant 2048 : i32
    %31 = vector.broadcast %c2048_i32 : i32 to vector<8x128xi32>
    %32 = arith.cmpi slt, %30, %31 : vector<8x128xi32>
    %cst_10 = arith.constant 0.000000e+00 : f32
    %33 = vector.broadcast %cst_10 : f32 to vector<8x128xf32>
    %34 = arith.select %32, %20, %33 : vector<8x128xi1>, vector<8x128xf32>
    %c0_11 = arith.constant 0 : index
    %c0_12 = arith.constant 0 : index
    %c0_13 = arith.constant 0 : index
    %35 = vector.load %arg4[%c0_11, %c0_12, %c0_13] : memref<1x8x128xf32, #tpu.memory_space<vmem>>, vector<1x8x128xf32>
    %36 = vector.shape_cast %35 : vector<1x8x128xf32> to vector<8x128xf32>
    %37 = vector.shape_cast %34 : vector<8x128xf32> to vector<1x8x128xf32>
    %cst_14 = arith.constant dense<0.000000e+00> : vector<8x128xf32>
    %38 = vector.multi_reduction <add>, %37, %cst_14 [0] : vector<1x8x128xf32> to vector<8x128xf32>
    %39 = arith.addf %36, %38 : vector<8x128xf32>
    %c0_15 = arith.constant 0 : index
    %c0_16 = arith.constant 0 : index
    %c0_17 = arith.constant 0 : index
    %40 = vector.load %arg4[%c0_15, %c0_16, %c0_17] : memref<1x8x128xf32, #tpu.memory_space<vmem>>, vector<1x8x128xf32>
    %41 = vector.shape_cast %40 : vector<1x8x128xf32> to vector<8x128xf32>
    %42 = vector.shape_cast %39 : vector<8x128xf32> to vector<1x8x128xf32>
    tpu.vector_store %arg4[%c0_15, %c0_16, %c0_17], %42 {strides = array<i32>} : memref<1x8x128xf32, #tpu.memory_space<vmem>>, vector<1x8x128xf32>,
    return
  }
  func.func @transform_0(%arg0: i32, %arg1: i32) -> (i32, i32, i32) {
    %c0_i32 = arith.constant 0 : i32
    %c0_i32_0 = arith.constant 0 : i32
    return %arg0, %arg1, %c0_i32 : i32, i32, i32
  }
  func.func @transform_1(%arg0: i32, %arg1: i32) -> (i32, i32, i32) {
    %c0_i32 = arith.constant 0 : i32
    %c0_i32_0 = arith.constant 0 : i32
    return %arg0, %arg1, %c0_i32 : i32, i32, i32
  }
  func.func @transform_2(%arg0: i32, %arg1: i32) -> (i32, i32, i32) {
    %c0_i32 = arith.constant 0 : i32
    %c0_i32_0 = arith.constant 0 : i32
    %c0_i32_1 = arith.constant 0 : i32
    return %arg0, %c0_i32, %c0_i32_0 : i32, i32, i32
  }
}

</mosaic_0001>

<llo_original>
// kernel: tpu_custom_call.1
$region0: #{tpu_custom_call.1}
  #allocation0 [shape = 'u32[]', space=smem, size = 0x4, offset = 0x4, fixed_abs, tag = 'smem constant byte address 0x4 - core index']
  #allocation1 [shape = 'u32[144,128]{1,0:T(1,128)}', space=vmem, size = 0x12000, scoped, tag = 'internal scratch']
  %s0 = inlined_call_operand.hbm [shape: f32[2,8,128], index: 0, kind: input, shape index: {}]
  %s1 = inlined_call_operand.hbm [shape: f32[2,8,128], index: 1, kind: input, shape index: {}]
  %s2 = inlined_call_operand.hbm [shape: f32[2,8,128], index: 2, kind: output, shape index: {}]
  %s3 = sld [smem:[#allocation0]]
  $region53: #{tpu_custom_call.1} parent=0
    _
  %s5 = ssub.s32 1, %s3
  %s6 = scalar_select 0, %s5, %s3
  $region1: #{tpu_custom_call.1} parent=0
    #allocation2 [shape = 'u8[8192]{0}', space=vmem, size = 0x2000, scoped, tag = 'input window, operand 0']
    #allocation3 [shape = 's32[2]{0}', space=sflag, size = 0x8, scoped, tag = 'scoped memory for tpu_custom_call.1']
    #allocation4 [shape = 's32[2]{0}', space=sflag, size = 0x8, scoped, tag = 'scoped memory for tpu_custom_call.1']
    #allocation5 [shape = 'u8[8192]{0}', space=vmem, size = 0x2000, scoped, tag = 'input window, operand 1']
    #allocation6 [shape = 's32[2]{0}', space=sflag, size = 0x8, scoped, tag = 'scoped memory for tpu_custom_call.1']
    #allocation7 [shape = 'u8[8192]{0}', space=vmem, size = 0x2000, scoped, tag = 'output window, operand 0']
    %7 = vsyncpa [#allocation3], 0
    %s8 = scalar_lea.sflag [#allocation3], 1
    %9 = vsyncpa %s8, 0
    %10 = vsyncpa [#allocation6], 0
    %s11 = scalar_lea.sflag [#allocation6], 1
    %12 = vsyncpa %s11, 0
    %13 = vsyncpa [#allocation4], 0
    %s14 = scalar_lea.sflag [#allocation4], 1
    %15 = vsyncpa %s14, 0
    loop: start=0, step=1, limit=4
    $region2: #{tpu_custom_call.1} parent=1 // loop_pre_header
      _
    $region3: #{tpu_custom_call.1} parent=1 // loop_header
      %s17 = sphi 0, %s21
      %p18 = scmp.ge.s32.totalorder %s17, 4
      %s24 = sphi 0, %s36
      %s25 = sphi 0, %s32
      %s26 = sphi 0, %s24
      %s27 = sphi 0, %s25
      %s28 = sphi 0, %s26
      %s29 = sphi 0, %s27
      %s41 = sphi 0, %s43
      %s44 = sphi 0, %s41
      %s45 = sphi 0, %s44
      %s61 = sphi 0, %s45
      %s69 = sphi 0, %s71
      %s72 = sphi 0, %s69
      %s73 = sphi 0, %s72
      %s89 = sphi 0, %s73
      %s95 = sphi 0, %s97
      %s98 = sphi 0, %s95
      %s99 = sphi 0, %s98
      %s115 = sphi 0, %s99
    $region4: #{tpu_custom_call.1} parent=1 // loop_header_branch
      %20 = sbr.rel (%p18) target = $region8
    $region5: #{tpu_custom_call.1} parent=1 // loop_body
      %s22 = ssub.s32 %s17, 1
      %s23 = ssub.s32 %s17, 2
      %s30 = sadd.s32 1, %s25
      %p31 = scmp.ge.s32.totalorder %s30, 1
      %s32 = scalar_select %p31, 0, %s30
      %s33 = sadd.s32 1, %s24
      %s34 = scalar_select %p31, %s33, %s24
      %p35 = scmp.ge.s32.totalorder %s34, 2
      %s36 = scalar_select %p35, 0, %s34
      %s37 = ssub.s32 %s24, %s36
      %s38 = ssub.s32 %s25, %s32
      %s39 = sor.u32 %s37, %s38
      %p40 = scmp.eq.s32.totalorder %s39, 0
      %s42 = sadd.s32 %s41, 1
      %s43 = scalar_select %p40, %s41, %s42
      %p46 = pneg %p40
      %p47 = scmp.eq.s32.totalorder %s17, 1
      %p48 = por %p46, %p47
      %p49 = scmp.ne.s32.totalorder %s41, %s44
      %p50 = scmp.eq.s32.totalorder %s17, 0
      %p51 = por %p49, %p50
      %p52 = scmp.ne.s32.totalorder %s41, %s44
      %p53 = scmp.eq.s32.totalorder %s22, 1
      %p54 = por %p52, %p53
      %p55 = scmp.ne.s32.totalorder %s44, %s45
      %p56 = scmp.eq.s32.totalorder %s22, 0
      %p57 = por %p55, %p56
      %p58 = scmp.ne.s32.totalorder %s44, %s45
      %p59 = scmp.eq.s32.totalorder %s23, 1
      %p60 = por %p58, %p59
      %p62 = scmp.ne.s32.totalorder %s45, %s61
      %p63 = scmp.eq.s32.totalorder %s23, 0
      %p64 = por %p62, %p63
      %s65 = ssub.s32 %s24, %s36
      %s66 = ssub.s32 %s25, %s32
      %s67 = sor.u32 %s65, %s66
      %p68 = scmp.eq.s32.totalorder %s67, 0
      %s70 = sadd.s32 %s69, 1
      %s71 = scalar_select %p68, %s69, %s70
      %p74 = pneg %p68
      %p75 = scmp.eq.s32.totalorder %s17, 1
      %p76 = por %p74, %p75
      %p77 = scmp.ne.s32.totalorder %s69, %s72
      %p78 = scmp.eq.s32.totalorder %s17, 0
      %p79 = por %p77, %p78
      %p80 = scmp.ne.s32.totalorder %s69, %s72
      %p81 = scmp.eq.s32.totalorder %s22, 1
      %p82 = por %p80, %p81
      %p83 = scmp.ne.s32.totalorder %s72, %s73
      %p84 = scmp.eq.s32.totalorder %s22, 0
      %p85 = por %p83, %p84
      %p86 = scmp.ne.s32.totalorder %s72, %s73
      %p87 = scmp.eq.s32.totalorder %s23, 1
      %p88 = por %p86, %p87
      %p90 = scmp.ne.s32.totalorder %s73, %s89
      %p91 = scmp.eq.s32.totalorder %s23, 0
      %p92 = por %p90, %p91
      %s93 = ssub.s32 %s24, %s36
      %p94 = scmp.eq.s32.totalorder %s93, 0
      %s96 = sadd.s32 %s95, 1
      %s97 = scalar_select %p94, %s95, %s96
      %p100 = pneg %p94
      %p101 = scmp.eq.s32.totalorder %s17, 1
      %p102 = por %p100, %p101
      %p103 = scmp.ne.s32.totalorder %s95, %s98
      %p104 = scmp.eq.s32.totalorder %s17, 0
      %p105 = por %p103, %p104
      %p106 = scmp.ne.s32.totalorder %s95, %s98
      %p107 = scmp.eq.s32.totalorder %s22, 1
      %p108 = por %p106, %p107
      %p109 = scmp.ne.s32.totalorder %s98, %s99
      %p110 = scmp.eq.s32.totalorder %s22, 0
      %p111 = por %p109, %p110
      %p112 = scmp.ne.s32.totalorder %s98, %s99
      %p113 = scmp.eq.s32.totalorder %s23, 1
      %p114 = por %p112, %p113
      %p116 = scmp.ne.s32.totalorder %s99, %s115
      %p117 = scmp.eq.s32.totalorder %s23, 0
      %p118 = por %p116, %p117
      %p119 = scmp.le.s32.totalorder 1, %s17
      %p120 = scmp.lt.s32.totalorder %s17, 3
      %p121 = pnand %p119, %p120
      %p122 = pneg %p121
      // Predicated region
      $region9: #{tpu_custom_call.1} parent=5 // pred_check
        _
      $region10: #{tpu_custom_call.1} parent=5 // pred_check_branch
        %124 = sbr.rel (%p121) target = $region12
      $region11: #{tpu_custom_call.1} parent=5 // pred_region
        %s125 = ssub.s32 %s17, 1
      $region12: #{tpu_custom_call.1} parent=5 // pred_fallthru
        _
      %p126 = scmp.lt.s32.totalorder %s17, 2
      // Predicated region
      $region13: #{tpu_custom_call.1} parent=5 // pred_check
        %p127 = pneg %p126
      $region14: #{tpu_custom_call.1} parent=5 // pred_check_branch
        %129 = sbr.rel (%p127) target = $region16
      $region15: #{tpu_custom_call.1} parent=5 // pred_region
        // Predicated region
        $region17: #{tpu_custom_call.1} parent=15 // pred_check
          %p130 = pneg %p51
        $region18: #{tpu_custom_call.1} parent=15 // pred_check_branch
          %132 = sbr.rel (%p130) target = $region20
        $region19: #{tpu_custom_call.1} parent=15 // pred_region
          %s133 = sand.u32 %s41, 1
          %s134 = scalar_lea.sflag [#allocation3], %s133
          %s135 = sand.u32 %s41, 1
          %s136 = smul.addr %s135, 8
          %s137 = scalar_lea.vmem [#allocation2], %s136
          %s139 = ssub.s32 128, 128
          %140 = vsyncadd %s134, %s139
          %s141 = sadd.s32 %s25, %s24
          %s142 = smul.addr %s141, 128
          %s143 = scalar_lea.hbm %s0, %s142
          %s145 = sshll.u32 %s137, 4
          %s146 = int_to_ptr.vmem [resolvable:$true] %s145
          %148 = dma.hbm_to_vmem [thread:$0]  %s143, 128, %s146, %s134
        $region20: #{tpu_custom_call.1} parent=15 // pred_fallthru
          _
        // Predicated region
        $region21: #{tpu_custom_call.1} parent=15 // pred_check
          %p149 = pneg %p79
        $region22: #{tpu_custom_call.1} parent=15 // pred_check_branch
          %151 = sbr.rel (%p149) target = $region24
        $region23: #{tpu_custom_call.1} parent=15 // pred_region
          %s152 = sand.u32 %s69, 1
          %s153 = scalar_lea.sflag [#allocation6], %s152
          %s154 = sand.u32 %s69, 1
          %s155 = smul.addr %s154, 8
          %s156 = scalar_lea.vmem [#allocation5], %s155
          %s158 = ssub.s32 128, 128
          %159 = vsyncadd %s153, %s158
          %s160 = sadd.s32 %s25, %s24
          %s161 = smul.addr %s160, 128
          %s162 = scalar_lea.hbm %s1, %s161
          %s164 = sshll.u32 %s156, 4
          %s165 = int_to_ptr.vmem [resolvable:$true] %s164
          %167 = dma.hbm_to_vmem [thread:$0]  %s162, 128, %s165, %s153
        $region24: #{tpu_custom_call.1} parent=15 // pred_fallthru
          _
      $region16: #{tpu_custom_call.1} parent=5 // pred_fallthru
        _
      %p168 = scmp.le.s32.totalorder 1, %s17
      %p169 = scmp.lt.s32.totalorder %s17, 3
      %p170 = pnand %p168, %p169
      %p171 = pneg %p170
      // Predicated region
      $region25: #{tpu_custom_call.1} parent=5 // pred_check
        _
      $region26: #{tpu_custom_call.1} parent=5 // pred_check_branch
        %173 = sbr.rel (%p170) target = $region28
      $region27: #{tpu_custom_call.1} parent=5 // pred_region
        %s174 = ssub.s32 %s17, 1
        %s175 = sand.u32 %s44, 1
        %s176 = scalar_lea.sflag [#allocation3], %s175
        %s177 = sand.u32 %s44, 1
        %s178 = smul.addr %s177, 8
        %s179 = scalar_lea.vmem [#allocation2], %s178
        // Predicated region
        $region29: #{tpu_custom_call.1} parent=27 // pred_check
          %p180 = pneg %p57
        $region30: #{tpu_custom_call.1} parent=27 // pred_check_branch
          %182 = sbr.rel (%p180) target = $region32
        $region31: #{tpu_custom_call.1} parent=27 // pred_region
          %183 = dma.done %s176, 128
        $region32: #{tpu_custom_call.1} parent=27 // pred_fallthru
          _
        %s184 = sand.u32 %s72, 1
        %s185 = scalar_lea.sflag [#allocation6], %s184
        %s186 = sand.u32 %s72, 1
        %s187 = smul.addr %s186, 8
        %s188 = scalar_lea.vmem [#allocation5], %s187
        // Predicated region
        $region33: #{tpu_custom_call.1} parent=27 // pred_check
          %p189 = pneg %p85
        $region34: #{tpu_custom_call.1} parent=27 // pred_check_branch
          %191 = sbr.rel (%p189) target = $region36
        $region35: #{tpu_custom_call.1} parent=27 // pred_region
          %192 = dma.done %s185, 128
        $region36: #{tpu_custom_call.1} parent=27 // pred_fallthru
          _
        %s193 = sand.u32 %s44, 1
        %s194 = scalar_lea.sflag [#allocation3], %s193
        %s195 = sand.u32 %s44, 1
        %s196 = smul.addr %s195, 8
        %s197 = scalar_lea.vmem [#allocation2], %s196
        %p198 = pneg %p57
        %p199 = pneg %p54
        %s200 = sand.u32 %s72, 1
        %s201 = scalar_lea.sflag [#allocation6], %s200
        %s202 = sand.u32 %s72, 1
        %s203 = smul.addr %s202, 8
        %s204 = scalar_lea.vmem [#allocation5], %s203
        %p205 = pneg %p85
        %p206 = pneg %p82
        %p207 = pneg %p111
        %p208 = pneg %p108
        %s209 = sand.u32 %s98, 1
        %s210 = scalar_lea.sflag [#allocation4], %s209
        %s211 = sand.u32 %s98, 1
        %s212 = smul.addr %s211, 8
        %s213 = scalar_lea.vmem [#allocation7], %s212
        %p214 = scmp.eq.s32.totalorder %s27, 0
        // Predicated region
        $region37: #{tpu_custom_call.1} parent=27 // pred_check
          %p215 = pneg %p214
        $region38: #{tpu_custom_call.1} parent=27 // pred_check_branch
          %217 = sbr.rel (%p215) target = $region40
        $region39: #{tpu_custom_call.1} parent=27 // pred_region
          %218 = vst [vmem:[%s213] sm:$0xff] 0.0
        $region40: #{tpu_custom_call.1} parent=27 // pred_fallthru
          _
        %v219 = vld [vmem:[%s179] sm:$0xff]
        %v220 = vld [vmem:[%s188] sm:$0xff]
        %v221 = vsub.f32 %v220, 1.0
        %v222 = vmul.f32 %v221, 0.25
        %v223 = vmax.f32 %v219, 0.0
        %v224 = vmul.f32 %v219, %v222
        %v225 = vsub.f32 %v223, %v224
        %v226 = vand.u32 2147483647, %v219
        %v227 = vsub.f32 0.0, %v226
        %v228 = vmul.f32 %v227, 1.442695
        %v229 = vpow.pop %v228
        %v230 = vadd.f32 %v229, 1.0
        %v231 = vlog2.pop %v230
        %v232 = vmul.f32 %v231, 0.6931472
        %v233 = vmul.f32 -0.5, %v229
        %v234 = vadd.f32 %v233, 1.0
        %v235 = vmul.f32 %v234, %v229
        %v236 = vand.u32 2147483647, %v229
        %vm237 = vcmp.lt.f32.partialorder %v236, 0.0004427343
        %v238 = vsel %vm237, %v235, %v232
        %v239 = vadd.f32 %v225, %v238
        %s240 = smul.u32 %s26, 8
        %s241 = smul.u32 %s27, 8
        %s242 = sadd.s32 %s240, %s241
        %v243 = vlaneseq
        %v244 = vshrl.u32 %v243, 7
        %v245 = vstv %s242
        %v246 = vadd.s32 %v244, %v245
        %v247 = vlaneseq
        %v248 = vand.u32 %v247, 127
        %v249 = vmul.u32 %v246, 128
        %v250 = vadd.s32 %v249, %v248
        %vm251 = vcmp.lt.s32.totalorder %v250, 2048
        %v252 = vsel %vm251, %v239, 0.0
        %v253 = vld [vmem:[%s213] sm:$0xff]
        %v254 = vadd.f32 %v252, 0.0
        %v255 = vadd.f32 %v253, %v254
        %256 = vst [vmem:[%s213] sm:$0xff] %v255
        %s257 = sand.u32 %s98, 1
        %s258 = scalar_lea.sflag [#allocation4], %s257
        %s259 = sand.u32 %s98, 1
        %s260 = smul.addr %s259, 8
        %s261 = scalar_lea.vmem [#allocation7], %s260
        // Predicated region
        $region41: #{tpu_custom_call.1} parent=27 // pred_check
          %p262 = pneg %p108
        $region42: #{tpu_custom_call.1} parent=27 // pred_check_branch
          %264 = sbr.rel (%p262) target = $region44
        $region43: #{tpu_custom_call.1} parent=27 // pred_region
          %s266 = ssub.s32 128, 128
          %267 = vsyncadd %s258, %s266
          %s268 = smul.addr %s26, 128
          %s269 = scalar_lea.hbm %s2, %s268
          %s271 = sshll.u32 %s261, 4
          %s272 = int_to_ptr.vmem [resolvable:$true] %s271
          %274 = dma.vmem_to_hbm [thread:$0]  %s272, 128, %s269, %s258
        $region44: #{tpu_custom_call.1} parent=27 // pred_fallthru
          _
      $region28: #{tpu_custom_call.1} parent=5 // pred_fallthru
        _
      %p275 = scmp.le.s32.totalorder 2, %s17
      // Predicated region
      $region45: #{tpu_custom_call.1} parent=5 // pred_check
        %p276 = pneg %p275
      $region46: #{tpu_custom_call.1} parent=5 // pred_check_branch
        %278 = sbr.rel (%p276) target = $region48
      $region47: #{tpu_custom_call.1} parent=5 // pred_region
        %s279 = ssub.s32 %s17, 2
        // Predicated region
        $region49: #{tpu_custom_call.1} parent=47 // pred_check
          %p280 = pneg %p114
        $region50: #{tpu_custom_call.1} parent=47 // pred_check_branch
          %282 = sbr.rel (%p280) target = $region52
        $region51: #{tpu_custom_call.1} parent=47 // pred_region
          %s283 = sand.u32 %s99, 1
          %s284 = scalar_lea.sflag [#allocation4], %s283
          %s285 = sand.u32 %s99, 1
          %s286 = smul.addr %s285, 8
          %s287 = scalar_lea.vmem [#allocation7], %s286
          %288 = dma.done %s284, 128
        $region52: #{tpu_custom_call.1} parent=47 // pred_fallthru
          _
      $region48: #{tpu_custom_call.1} parent=5 // pred_fallthru
        _
    $region6: #{tpu_custom_call.1} parent=1 // loop_footer
      %s21 = sadd.s32 1, %s17
    $region7: #{tpu_custom_call.1} parent=1 // loop_footer_branch
      %16 = sbr.rel target = $region3
    $region8: #{tpu_custom_call.1} parent=1 // loop_exit
      _
    %289 = vsyncpa [#allocation3], 1
    %s290 = scalar_lea.sflag [#allocation3], 1
    %291 = vsyncpa %s290, 1
    %292 = vsyncpa [#allocation6], 1
    %s293 = scalar_lea.sflag [#allocation6], 1
    %294 = vsyncpa %s293, 1
    %295 = vsyncpa [#allocation4], 1
    %s296 = scalar_lea.sflag [#allocation4], 1
    %297 = vsyncpa %s296, 1

</llo_original>
